<compile_context>
chip_gen: v5e
topology: v5e:2x2
jax: 0.10.0
libtpu: 0.0.40
codegen_flags: <defaults>
</compile_context>

<pallas_src>
import numpy as np
import jax
import jax.numpy as jnp
from jax.experimental import pallas as pl
from jax.experimental.pallas import tpu as pltpu


def _transition_kernel(x_ref, scale_ref, shift_ref, w_ref, o_ref):
    # x_ref:     (1, 4, TR, Cin)  4 pool taps, TR pooled-pixel rows, channels on lanes
    # scale_ref: (1, Cin)         folded BN scale = gamma / sqrt(var + eps)
    # shift_ref: (1, Cin)         folded BN shift = beta - mean * scale
    # w_ref:     (Cin, Cout)      1x1 conv weight (bf16 or f32)
    # o_ref:     (1, TR, Cout)
    s = scale_ref[...]                                    # (1, Cin) broadcasts over rows
    b = shift_ref[...]
    acc = None
    for tap in range(4):                                  # BN(eval) + ReLU per tap, VPU
        v = jnp.maximum(x_ref[0, tap] * s + b, 0.0)       # (TR, Cin)
        acc = v if acc is None else acc + v
    pooled = acc * 0.25                                   # 2x2 average pool, VPU
    y = jnp.dot(pooled.astype(w_ref.dtype), w_ref[...],   # 1x1 conv on pooled rows, MXU
                preferred_element_type=jnp.float32)
    o_ref[0] = y.astype(o_ref.dtype)


def _pick_row_tile(hwo, max_rows=512):
    """Largest tile of pooled rows that divides hwo; multiple of 8 when tiling."""
    if hwo <= max_rows:
        return hwo
    for t in range(max_rows, 7, -1):
        if hwo % t == 0 and t % 8 == 0:
            return t
    return hwo  # fall back to one block over the whole pooled image


def transition_block(x_nchw, gamma, beta, running_mean, running_var, conv_w,
                     eps=1e-5, use_bf16=True):
    """x_nchw: (N, Cin, H, W) float32. conv_w: (Cout, Cin) (1x1 kernel squeezed)."""
    N, Cin, H, W = x_nchw.shape
    Cout = conv_w.shape[0]
    Ho, Wo = H // 2, W // 2
    HWo = Ho * Wo
    TR = _pick_row_tile(HWo)
    n_row_tiles = HWo // TR

    # ---- glue: BN folding + layout (one transpose; AvgPool2d floor behavior) ----
    scale = (gamma * jax.lax.rsqrt(running_var + eps)).reshape(1, Cin).astype(jnp.float32)
    shift = (beta - running_mean * gamma * jax.lax.rsqrt(running_var + eps))
    shift = shift.reshape(1, Cin).astype(jnp.float32)
    w = jnp.transpose(conv_w, (1, 0))                     # (Cin, Cout)
    w = w.astype(jnp.bfloat16 if use_bf16 else jnp.float32)

    x_crop = x_nchw[:, :, : 2 * Ho, : 2 * Wo]             # AvgPool2d(2,2) drops odd edges
    # (N,C,H,W) -> (N, 4 taps, Ho*Wo, Cin), channels-last for lane-major compute.
    x_taps = x_crop.reshape(N, Cin, Ho, 2, Wo, 2)
    x_taps = jnp.transpose(x_taps, (0, 3, 5, 2, 4, 1)).reshape(N, 4, HWo, Cin)
    x_taps = x_taps.astype(jnp.float32)

    w_bytes = int(np.prod(w.shape)) * (2 if use_bf16 else 4)
    cost = pl.CostEstimate(
        flops=2 * N * HWo * Cin * Cout + 8 * N * HWo * 4 * Cin,
        transcendentals=0,
        bytes_accessed=x_taps.size * 4 + w_bytes + 2 * Cin * 4 + N * HWo * Cout * 4,
    )

    out_flat = pl.pallas_call(
        _transition_kernel,
        out_shape=jax.ShapeDtypeStruct((N, HWo, Cout), jnp.float32),
        grid_spec=pltpu.PrefetchScalarGridSpec(
            num_scalar_prefetch=0,
            grid=(N, n_row_tiles),
            in_specs=[
                pl.BlockSpec((1, 4, TR, Cin), lambda n, t: (n, 0, t, 0)),
                pl.BlockSpec((1, Cin), lambda n, t: (0, 0)),
                pl.BlockSpec((1, Cin), lambda n, t: (0, 0)),
                pl.BlockSpec((Cin, Cout), lambda n, t: (0, 0)),
            ],
            out_specs=pl.BlockSpec((1, TR, Cout), lambda n, t: (n, t, 0)),
        ),
        compiler_params=pltpu.CompilerParams(
            dimension_semantics=("parallel", "parallel"),
        ),
        cost_estimate=cost,
    )(x_taps, scale, shift, w)

    # (N, HWo, Cout) -> NCHW (kept only for PyTorch interface parity).
    out = out_flat.reshape(N, Ho, Wo, Cout).transpose(0, 3, 1, 2)
    return out


def transition_block_ref(x_nchw, gamma, beta, running_mean, running_var, conv_w, eps=1e-5):
    """Pure-JAX reference (eval-mode BN + ReLU + 1x1 conv + 2x2 avg pool), NCHW."""
    N, Cin, H, W = x_nchw.shape
    Cout = conv_w.shape[0]
    xn = (x_nchw - running_mean[None, :, None, None]) / jnp.sqrt(
        running_var[None, :, None, None] + eps
    ) * gamma[None, :, None, None] + beta[None, :, None, None]
    xn = jnp.maximum(xn, 0.0)
    y = jnp.einsum("nchw,oc->nohw", xn, conv_w)
    y = y.reshape(N, Cout, H // 2, 2, W // 2, 2).mean(axis=(3, 5))
    return y


if __name__ == "__main__":
    key = jax.random.PRNGKey(0)
    k_x, k_g, k_b, k_m, k_v, k_w = jax.random.split(key, 6)

    N, Cin, H, W = 2, 4, 16, 16
    Cout = 8

    x = jax.random.normal(k_x, (N, Cin, H, W), dtype=jnp.float32)
    gamma = 1.0 + 0.1 * jax.random.normal(k_g, (Cin,), dtype=jnp.float32)
    beta = 0.1 * jax.random.normal(k_b, (Cin,), dtype=jnp.float32)
    running_mean = 0.1 * jax.random.normal(k_m, (Cin,), dtype=jnp.float32)
    running_var = jnp.abs(jax.random.normal(k_v, (Cin,), dtype=jnp.float32)) + 0.5
    conv_w = jax.random.normal(k_w, (Cout, Cin), dtype=jnp.float32) * 0.1  # 1x1 kernel

    ref = transition_block_ref(x, gamma, beta, running_mean, running_var, conv_w)

    # Exactness check with f32 matmul operands.
    out_f32 = transition_block(x, gamma, beta, running_mean, running_var, conv_w,
                               use_bf16=False)
    out_f32 = jax.block_until_ready(out_f32)
    assert out_f32.shape == (N, Cout, H // 2, W // 2), out_f32.shape
    np.testing.assert_allclose(np.asarray(out_f32), np.asarray(ref), rtol=1e-5, atol=1e-5)

    # Production path: bf16 MXU operands, f32 accumulation.
    out_bf16 = transition_block(x, gamma, beta, running_mean, running_var, conv_w,
                                use_bf16=True)
    out_bf16 = jax.block_until_ready(out_bf16)
    np.testing.assert_allclose(np.asarray(out_bf16), np.asarray(ref), rtol=2e-2, atol=2e-2)

    print("KERNEL_OK")
</pallas_src>

<mosaic_0001>
module attributes {stable_mosaic.version = 11 : i64} {
  func.func @_transition_kernel(%arg0: i32, %arg1: i32, %arg2: memref<1x4x64x4xf32, #tpu.memory_space<vmem>>, %arg3: memref<1x4xf32, #tpu.memory_space<vmem>>, %arg4: memref<1x4xf32, #tpu.memory_space<vmem>>, %arg5: memref<4x8xf32, #tpu.memory_space<vmem>>, %arg6: memref<1x64x8xf32, #tpu.memory_space<vmem>>) attributes {dimension_semantics = [#tpu.dimension_semantics<parallel>, #tpu.dimension_semantics<parallel>], iteration_bounds = array<i64: 2, 1>, scalar_prefetch = 0 : i64, scratch_operands = 0 : i64, tpu.core_type = #tpu.core_type<tc>, window_params = [{transform_indices = @transform_0, window_bounds = array<i64: 1, 4, 64, 4>}, {pipeline_mode = #tpu.pipeline_mode<synchronous>, transform_indices = @transform_1, window_bounds = array<i64: 1, 4>}, {pipeline_mode = #tpu.pipeline_mode<synchronous>, transform_indices = @transform_2, window_bounds = array<i64: 1, 4>}, {pipeline_mode = #tpu.pipeline_mode<synchronous>, transform_indices = @transform_3, window_bounds = array<i64: 4, 8>}, {transform_indices = @transform_4, window_bounds = array<i64: 1, 64, 8>}]} {
    %c0 = arith.constant 0 : index
    %c0_0 = arith.constant 0 : index
    %0 = vector.load %arg3[%c0, %c0_0] : memref<1x4xf32, #tpu.memory_space<vmem>>, vector<1x4xf32>
    %c0_1 = arith.constant 0 : index
    %c0_2 = arith.constant 0 : index
    %1 = vector.load %arg4[%c0_1, %c0_2] : memref<1x4xf32, #tpu.memory_space<vmem>>, vector<1x4xf32>
    %c0_3 = arith.constant 0 : index
    %c0_4 = arith.constant 0 : index
    %c0_5 = arith.constant 0 : index
    %c0_6 = arith.constant 0 : index
    %2 = vector.load %arg2[%c0_3, %c0_4, %c0_5, %c0_6] : memref<1x4x64x4xf32, #tpu.memory_space<vmem>>, vector<1x1x64x4xf32>
    %3 = vector.shape_cast %2 : vector<1x1x64x4xf32> to vector<64x4xf32>
    %4 = vector.broadcast %0 : vector<1x4xf32> to vector<64x4xf32>
    %5 = arith.mulf %3, %4 : vector<64x4xf32>
    %6 = vector.broadcast %1 : vector<1x4xf32> to vector<64x4xf32>
    %7 = arith.addf %5, %6 : vector<64x4xf32>
    %cst = arith.constant 0.000000e+00 : f32
    %8 = vector.broadcast %cst : f32 to vector<64x4xf32>
    %9 = arith.maximumf %7, %8 : vector<64x4xf32>
    %c0_7 = arith.constant 0 : index
    %c1 = arith.constant 1 : index
    %c0_8 = arith.constant 0 : index
    %c0_9 = arith.constant 0 : index
    %10 = vector.load %arg2[%c0_7, %c1, %c0_8, %c0_9] : memref<1x4x64x4xf32, #tpu.memory_space<vmem>>, vector<1x1x64x4xf32>
    %11 = vector.shape_cast %10 : vector<1x1x64x4xf32> to vector<64x4xf32>
    %12 = vector.broadcast %0 : vector<1x4xf32> to vector<64x4xf32>
    %13 = arith.mulf %11, %12 : vector<64x4xf32>
    %14 = vector.broadcast %1 : vector<1x4xf32> to vector<64x4xf32>
    %15 = arith.addf %13, %14 : vector<64x4xf32>
    %cst_10 = arith.constant 0.000000e+00 : f32
    %16 = vector.broadcast %cst_10 : f32 to vector<64x4xf32>
    %17 = arith.maximumf %15, %16 : vector<64x4xf32>
    %18 = arith.addf %9, %17 : vector<64x4xf32>
    %c0_11 = arith.constant 0 : index
    %c2 = arith.constant 2 : index
    %c0_12 = arith.constant 0 : index
    %c0_13 = arith.constant 0 : index
    %19 = vector.load %arg2[%c0_11, %c2, %c0_12, %c0_13] : memref<1x4x64x4xf32, #tpu.memory_space<vmem>>, vector<1x1x64x4xf32>
    %20 = vector.shape_cast %19 : vector<1x1x64x4xf32> to vector<64x4xf32>
    %21 = vector.broadcast %0 : vector<1x4xf32> to vector<64x4xf32>
    %22 = arith.mulf %20, %21 : vector<64x4xf32>
    %23 = vector.broadcast %1 : vector<1x4xf32> to vector<64x4xf32>
    %24 = arith.addf %22, %23 : vector<64x4xf32>
    %cst_14 = arith.constant 0.000000e+00 : f32
    %25 = vector.broadcast %cst_14 : f32 to vector<64x4xf32>
    %26 = arith.maximumf %24, %25 : vector<64x4xf32>
    %27 = arith.addf %18, %26 : vector<64x4xf32>
    %c0_15 = arith.constant 0 : index
    %c3 = arith.constant 3 : index
    %c0_16 = arith.constant 0 : index
    %c0_17 = arith.constant 0 : index
    %28 = vector.load %arg2[%c0_15, %c3, %c0_16, %c0_17] : memref<1x4x64x4xf32, #tpu.memory_space<vmem>>, vector<1x1x64x4xf32>
    %29 = vector.shape_cast %28 : vector<1x1x64x4xf32> to vector<64x4xf32>
    %30 = vector.broadcast %0 : vector<1x4xf32> to vector<64x4xf32>
    %31 = arith.mulf %29, %30 : vector<64x4xf32>
    %32 = vector.broadcast %1 : vector<1x4xf32> to vector<64x4xf32>
    %33 = arith.addf %31, %32 : vector<64x4xf32>
    %cst_18 = arith.constant 0.000000e+00 : f32
    %34 = vector.broadcast %cst_18 : f32 to vector<64x4xf32>
    %35 = arith.maximumf %33, %34 : vector<64x4xf32>
    %36 = arith.addf %27, %35 : vector<64x4xf32>
    %cst_19 = arith.constant 2.500000e-01 : f32
    %37 = vector.broadcast %cst_19 : f32 to vector<64x4xf32>
    %38 = arith.mulf %36, %37 : vector<64x4xf32>
    %c0_20 = arith.constant 0 : index
    %c0_21 = arith.constant 0 : index
    %39 = vector.load %arg5[%c0_20, %c0_21] : memref<4x8xf32, #tpu.memory_space<vmem>>, vector<4x8xf32>
    %cst_22 = arith.constant dense<0.000000e+00> : vector<64x8xf32>
    %40 = tpu.matmul %38, %39, %cst_22 {dimension_numbers = #tpu.dot_dimension_numbers<[1], [0], [0], [1], [0, 0, 1, 1], [], []>} : vector<64x4xf32>, vector<4x8xf32>, vector<64x8xf32> -> vector<64x8xf32>
    %c0_23 = arith.constant 0 : index
    %c0_24 = arith.constant 0 : index
    %c0_25 = arith.constant 0 : index
    %41 = vector.load %arg6[%c0_23, %c0_24, %c0_25] : memref<1x64x8xf32, #tpu.memory_space<vmem>>, vector<1x64x8xf32>
    %42 = vector.shape_cast %41 : vector<1x64x8xf32> to vector<64x8xf32>
    %43 = vector.shape_cast %40 : vector<64x8xf32> to vector<1x64x8xf32>
    tpu.vector_store %arg6[%c0_23, %c0_24, %c0_25], %43 {strides = array<i32>} : memref<1x64x8xf32, #tpu.memory_space<vmem>>, vector<1x64x8xf32>,
    return
  }
  func.func @transform_0(%arg0: i32, %arg1: i32) -> (i32, i32, i32, i32) {
    %c0_i32 = arith.constant 0 : i32
    %c0_i32_0 = arith.constant 0 : i32
    %c0_i32_1 = arith.constant 0 : i32
    return %arg0, %c0_i32, %arg1, %c0_i32_0 : i32, i32, i32, i32
  }
  func.func @transform_1(%arg0: i32, %arg1: i32) -> (i32, i32) {
    %c0_i32 = arith.constant 0 : i32
    %c0_i32_0 = arith.constant 0 : i32
    %c0_i32_1 = arith.constant 0 : i32
    return %c0_i32, %c0_i32_0 : i32, i32
  }
  func.func @transform_2(%arg0: i32, %arg1: i32) -> (i32, i32) {
    %c0_i32 = arith.constant 0 : i32
    %c0_i32_0 = arith.constant 0 : i32
    %c0_i32_1 = arith.constant 0 : i32
    return %c0_i32, %c0_i32_0 : i32, i32
  }
  func.func @transform_3(%arg0: i32, %arg1: i32) -> (i32, i32) {
    %c0_i32 = arith.constant 0 : i32
    %c0_i32_0 = arith.constant 0 : i32
    %c0_i32_1 = arith.constant 0 : i32
    return %c0_i32, %c0_i32_0 : i32, i32
  }
  func.func @transform_4(%arg0: i32, %arg1: i32) -> (i32, i32, i32) {
    %c0_i32 = arith.constant 0 : i32
    %c0_i32_0 = arith.constant 0 : i32
    return %arg0, %arg1, %c0_i32 : i32, i32, i32
  }
}

</mosaic_0001>

<llo_original>
// kernel: tpu_custom_call.1
$region0: #{tpu_custom_call.1}
  #allocation0 [shape = 'u32[]', space=smem, size = 0x4, offset = 0x4, fixed_abs, tag = 'smem constant byte address 0x4 - core index']
  #allocation1 [shape = 'u32[72,128]{1,0:T(1,128)}', space=vmem, size = 0x9000, scoped, tag = 'internal scratch']
  %s0 = inlined_call_operand.vmem [shape: f32[2,4,64,4], index: 0, kind: input, shape index: {}]
  %s1 = inlined_call_operand.vmem [shape: f32[1,4], index: 1, kind: input, shape index: {}]
  %s2 = inlined_call_operand.vmem [shape: f32[1,4], index: 2, kind: input, shape index: {}]
  %s3 = inlined_call_operand.vmem [shape: f32[4,8], index: 3, kind: input, shape index: {}]
  %s4 = inlined_call_operand.vmem [shape: f32[2,64,8], index: 4, kind: output, shape index: {}]
  %s5 = sld [smem:[#allocation0]]
  $region49: #{tpu_custom_call.1} parent=0
    _
  %s7 = ssub.s32 1, %s5
  %s8 = scalar_select 0, %s7, %s5
  loop: start=0, step=1, limit=4
  $region2: #{tpu_custom_call.1} parent=0 // loop_pre_header
    _
  $region3: #{tpu_custom_call.1} parent=0 // loop_header
    %s10 = sphi 0, %s14
    %p11 = scmp.ge.s32.totalorder %s10, 4
    %s17 = sphi 0, %s29
    %s18 = sphi 0, %s25
    %s19 = sphi 0, %s17
    %s20 = sphi 0, %s18
    %s21 = sphi 0, %s19
    %s22 = sphi 0, %s20
    %s34 = sphi 0, %s36
    %s37 = sphi 0, %s34
    %s38 = sphi 0, %s37
    %s54 = sphi 0, %s38
    %s58 = sphi 0, %s58
    %s60 = sphi 0, %s58
    %s61 = sphi 0, %s60
    %s75 = sphi 0, %s61
    %s79 = sphi 0, %s79
    %s81 = sphi 0, %s79
    %s82 = sphi 0, %s81
    %s96 = sphi 0, %s82
    %s100 = sphi 0, %s100
    %s102 = sphi 0, %s100
    %s103 = sphi 0, %s102
    %s117 = sphi 0, %s103
    %s125 = sphi 0, %s127
    %s128 = sphi 0, %s125
    %s129 = sphi 0, %s128
    %s145 = sphi 0, %s129
  $region4: #{tpu_custom_call.1} parent=0 // loop_header_branch
    %13 = sbr.rel (%p11) target = $region8
  $region5: #{tpu_custom_call.1} parent=0 // loop_body
    %s15 = ssub.s32 %s10, 1
    %s16 = ssub.s32 %s10, 2
    %s23 = sadd.s32 1, %s18
    %p24 = scmp.ge.s32.totalorder %s23, 1
    %s25 = scalar_select %p24, 0, %s23
    %s26 = sadd.s32 1, %s17
    %s27 = scalar_select %p24, %s26, %s17
    %p28 = scmp.ge.s32.totalorder %s27, 2
    %s29 = scalar_select %p28, 0, %s27
    %s30 = ssub.s32 %s17, %s29
    %s31 = ssub.s32 %s18, %s25
    %s32 = sor.u32 %s30, %s31
    %p33 = scmp.eq.s32.totalorder %s32, 0
    %s35 = sadd.s32 %s34, 1
    %s36 = scalar_select %p33, %s34, %s35
    %p39 = pneg %p33
    %p40 = scmp.eq.s32.totalorder %s10, 1
    %p41 = por %p39, %p40
    %p42 = scmp.ne.s32.totalorder %s34, %s37
    %p43 = scmp.eq.s32.totalorder %s10, 0
    %p44 = por %p42, %p43
    %p45 = scmp.ne.s32.totalorder %s34, %s37
    %p46 = scmp.eq.s32.totalorder %s15, 1
    %p47 = por %p45, %p46
    %p48 = scmp.ne.s32.totalorder %s37, %s38
    %p49 = scmp.eq.s32.totalorder %s15, 0
    %p50 = por %p48, %p49
    %p51 = scmp.ne.s32.totalorder %s37, %s38
    %p52 = scmp.eq.s32.totalorder %s16, 1
    %p53 = por %p51, %p52
    %p55 = scmp.ne.s32.totalorder %s38, %s54
    %p56 = scmp.eq.s32.totalorder %s16, 0
    %p57 = por %p55, %p56
    %s59 = sadd.s32 %s58, 1
    %p62 = scmp.eq.s32.totalorder %s10, 1
    %p63 = scmp.ne.s32.totalorder %s58, %s60
    %p64 = scmp.eq.s32.totalorder %s10, 0
    %p65 = por %p63, %p64
    %p66 = scmp.ne.s32.totalorder %s58, %s60
    %p67 = scmp.eq.s32.totalorder %s15, 1
    %p68 = por %p66, %p67
    %p69 = scmp.ne.s32.totalorder %s60, %s61
    %p70 = scmp.eq.s32.totalorder %s15, 0
    %p71 = por %p69, %p70
    %p72 = scmp.ne.s32.totalorder %s60, %s61
    %p73 = scmp.eq.s32.totalorder %s16, 1
    %p74 = por %p72, %p73
    %p76 = scmp.ne.s32.totalorder %s61, %s75
    %p77 = scmp.eq.s32.totalorder %s16, 0
    %p78 = por %p76, %p77
    %s80 = sadd.s32 %s79, 1
    %p83 = scmp.eq.s32.totalorder %s10, 1
    %p84 = scmp.ne.s32.totalorder %s79, %s81
    %p85 = scmp.eq.s32.totalorder %s10, 0
    %p86 = por %p84, %p85
    %p87 = scmp.ne.s32.totalorder %s79, %s81
    %p88 = scmp.eq.s32.totalorder %s15, 1
    %p89 = por %p87, %p88
    %p90 = scmp.ne.s32.totalorder %s81, %s82
    %p91 = scmp.eq.s32.totalorder %s15, 0
    %p92 = por %p90, %p91
    %p93 = scmp.ne.s32.totalorder %s81, %s82
    %p94 = scmp.eq.s32.totalorder %s16, 1
    %p95 = por %p93, %p94
    %p97 = scmp.ne.s32.totalorder %s82, %s96
    %p98 = scmp.eq.s32.totalorder %s16, 0
    %p99 = por %p97, %p98
    %s101 = sadd.s32 %s100, 1
    %p104 = scmp.eq.s32.totalorder %s10, 1
    %p105 = scmp.ne.s32.totalorder %s100, %s102
    %p106 = scmp.eq.s32.totalorder %s10, 0
    %p107 = por %p105, %p106
    %p108 = scmp.ne.s32.totalorder %s100, %s102
    %p109 = scmp.eq.s32.totalorder %s15, 1
    %p110 = por %p108, %p109
    %p111 = scmp.ne.s32.totalorder %s102, %s103
    %p112 = scmp.eq.s32.totalorder %s15, 0
    %p113 = por %p111, %p112
    %p114 = scmp.ne.s32.totalorder %s102, %s103
    %p115 = scmp.eq.s32.totalorder %s16, 1
    %p116 = por %p114, %p115
    %p118 = scmp.ne.s32.totalorder %s103, %s117
    %p119 = scmp.eq.s32.totalorder %s16, 0
    %p120 = por %p118, %p119
    %s121 = ssub.s32 %s17, %s29
    %s122 = ssub.s32 %s18, %s25
    %s123 = sor.u32 %s121, %s122
    %p124 = scmp.eq.s32.totalorder %s123, 0
    %s126 = sadd.s32 %s125, 1
    %s127 = scalar_select %p124, %s125, %s126
    %p130 = pneg %p124
    %p131 = scmp.eq.s32.totalorder %s10, 1
    %p132 = por %p130, %p131
    %p133 = scmp.ne.s32.totalorder %s125, %s128
    %p134 = scmp.eq.s32.totalorder %s10, 0
    %p135 = por %p133, %p134
    %p136 = scmp.ne.s32.totalorder %s125, %s128
    %p137 = scmp.eq.s32.totalorder %s15, 1
    %p138 = por %p136, %p137
    %p139 = scmp.ne.s32.totalorder %s128, %s129
    %p140 = scmp.eq.s32.totalorder %s15, 0
    %p141 = por %p139, %p140
    %p142 = scmp.ne.s32.totalorder %s128, %s129
    %p143 = scmp.eq.s32.totalorder %s16, 1
    %p144 = por %p142, %p143
    %p146 = scmp.ne.s32.totalorder %s129, %s145
    %p147 = scmp.eq.s32.totalorder %s16, 0
    %p148 = por %p146, %p147
    %p149 = scmp.le.s32.totalorder 1, %s10
    %p150 = scmp.lt.s32.totalorder %s10, 3
    %p151 = pnand %p149, %p150
    %p152 = pneg %p151
    // Predicated region
    $region9: #{tpu_custom_call.1} parent=5 // pred_check
      _
    $region10: #{tpu_custom_call.1} parent=5 // pred_check_branch
      %154 = sbr.rel (%p151) target = $region12
    $region11: #{tpu_custom_call.1} parent=5 // pred_region
      %s155 = ssub.s32 %s10, 1
      // Predicated region
      $region13: #{tpu_custom_call.1} parent=11 // pred_check
        %p156 = pneg %p71
      $region14: #{tpu_custom_call.1} parent=11 // pred_check_branch
        %158 = sbr.rel (%p156) target = $region16
      $region15: #{tpu_custom_call.1} parent=11 // pred_region
        _
      $region16: #{tpu_custom_call.1} parent=11 // pred_fallthru
        _
      // Predicated region
      $region17: #{tpu_custom_call.1} parent=11 // pred_check
        %p159 = pneg %p92
      $region18: #{tpu_custom_call.1} parent=11 // pred_check_branch
        %161 = sbr.rel (%p159) target = $region20
      $region19: #{tpu_custom_call.1} parent=11 // pred_region
        _
      $region20: #{tpu_custom_call.1} parent=11 // pred_fallthru
        _
      // Predicated region
      $region21: #{tpu_custom_call.1} parent=11 // pred_check
        %p162 = pneg %p113
      $region22: #{tpu_custom_call.1} parent=11 // pred_check_branch
        %164 = sbr.rel (%p162) target = $region24
      $region23: #{tpu_custom_call.1} parent=11 // pred_region
        _
      $region24: #{tpu_custom_call.1} parent=11 // pred_fallthru
        _
    $region12: #{tpu_custom_call.1} parent=5 // pred_fallthru
      _
    %p165 = scmp.lt.s32.totalorder %s10, 2
    // Predicated region
    $region25: #{tpu_custom_call.1} parent=5 // pred_check
      %p166 = pneg %p165
    $region26: #{tpu_custom_call.1} parent=5 // pred_check_branch
      %168 = sbr.rel (%p166) target = $region28
    $region27: #{tpu_custom_call.1} parent=5 // pred_region
      // Predicated region
      $region29: #{tpu_custom_call.1} parent=27 // pred_check
        %p169 = pneg %p44
      $region30: #{tpu_custom_call.1} parent=27 // pred_check_branch
        %171 = sbr.rel (%p169) target = $region32
      $region31: #{tpu_custom_call.1} parent=27 // pred_region
        %s172 = smul.u32 8, %s18
        %p173 = scmp.lt.s32.totalorder %s17, 1
        %s174 = scalar_select %p173, %s17, 1
        %p175 = scmp.lt.s32.totalorder %s172, 7
        %s176 = scalar_select %p175, %s172, 7
        %s177 = smul.addr %s174, 32
        %s178 = sadd.s32 %s176, %s177
        %s179 = smul.addr %s178, 8
        %s180 = scalar_lea.vmem %s0, %s179
        %s181 = smul.u32 8, %s18
      $region32: #{tpu_custom_call.1} parent=27 // pred_fallthru
        _
    $region28: #{tpu_custom_call.1} parent=5 // pred_fallthru
      _
    %p182 = scmp.le.s32.totalorder 1, %s10
    %p183 = scmp.lt.s32.totalorder %s10, 3
    %p184 = pnand %p182, %p183
    %p185 = pneg %p184
    // Predicated region
    $region33: #{tpu_custom_call.1} parent=5 // pred_check
      _
    $region34: #{tpu_custom_call.1} parent=5 // pred_check_branch
      %187 = sbr.rel (%p184) target = $region36
    $region35: #{tpu_custom_call.1} parent=5 // pred_region
      %s188 = ssub.s32 %s10, 1
      %s189 = smul.u32 8, %s20
      %p190 = scmp.lt.s32.totalorder %s19, 1
      %s191 = scalar_select %p190, %s19, 1
      %p192 = scmp.lt.s32.totalorder %s189, 7
      %s193 = scalar_select %p192, %s189, 7
      %s194 = smul.addr %s191, 32
      %s195 = sadd.s32 %s193, %s194
      %s196 = smul.addr %s195, 8
      %s197 = scalar_lea.vmem %s0, %s196
      %p198 = pneg %p50
      %p199 = pneg %p47
      %p200 = pneg %p71
      %p201 = pneg %p68
      %p202 = pneg %p92
      %p203 = pneg %p89
      %p204 = pneg %p113
      %p205 = pneg %p110
      %p206 = pneg %p141
      %p207 = pneg %p138
      %s208 = smul.u32 8, %s20
      %p209 = scmp.lt.s32.totalorder %s19, 1
      %s210 = scalar_select %p209, %s19, 1
      %p211 = scmp.lt.s32.totalorder %s208, 7
      %s212 = scalar_select %p211, %s208, 7
      %s213 = smul.addr %s210, 8
      %s214 = sadd.s32 %s212, %s213
      %s215 = smul.addr %s214, 8
      %s216 = scalar_lea.vmem %s4, %s215
      %s217 = smul.u32 8, %s20
      %p218 = scmp.lt.s32.totalorder %s19, 1
      %s219 = scalar_select %p218, %s19, 1
      %p220 = scmp.lt.s32.totalorder %s217, 7
      %s221 = scalar_select %p220, %s217, 7
      %s222 = smul.addr %s219, 32
      %s223 = sadd.s32 %s221, %s222
      %s224 = smul.addr %s223, 8
      %s225 = scalar_lea.vmem %s0, %s224
      %s226 = smul.u32 8, %s20
      %s227 = smul.u32 8, %s20
      %p228 = scmp.lt.s32.totalorder %s19, 1
      %s229 = scalar_select %p228, %s19, 1
      %p230 = scmp.lt.s32.totalorder %s227, 7
      %s231 = scalar_select %p230, %s227, 7
      %s232 = smul.addr %s229, 8
      %s233 = sadd.s32 %s231, %s232
      %s234 = smul.addr %s233, 8
      %s235 = scalar_lea.vmem %s4, %s234
      %s236 = smul.u32 8, %s20
      %v237 = vld [vmem:[%s1] sm:$0x1]
      %v238 = vld [vmem:[%s2] sm:$0x1]
      %v239 = vld [vmem:[%s225] sm:$0xff]
      %v240 = vld [vmem:[%s225 + $0x8] sm:$0xff]
      %v241 = vld [vmem:[%s225 + $0x10] sm:$0xff]
      %v242 = vld [vmem:[%s225 + $0x18] sm:$0xff]
      %v243 = vld [vmem:[%s225 + $0x20] sm:$0xff]
      %v244 = vld [vmem:[%s225 + $0x28] sm:$0xff]
      %v245 = vld [vmem:[%s225 + $0x30] sm:$0xff]
      %v246 = vld [vmem:[%s225 + $0x38] sm:$0xff]
      %v248 = vperm.slane %v237, 0
      %v250 = vmul.f32 %v239, %v248
      %v251 = vmul.f32 %v240, %v248
      %v252 = vmul.f32 %v241, %v248
      %v253 = vmul.f32 %v242, %v248
      %v254 = vmul.f32 %v243, %v248
      %v255 = vmul.f32 %v244, %v248
      %v256 = vmul.f32 %v245, %v248
      %v257 = vmul.f32 %v246, %v248
      %v259 = vperm.slane %v238, 0
      %v261 = vadd.f32 %v250, %v259
      %v262 = vadd.f32 %v251, %v259
      %v263 = vadd.f32 %v252, %v259
      %v264 = vadd.f32 %v253, %v259
      %v265 = vadd.f32 %v254, %v259
      %v266 = vadd.f32 %v255, %v259
      %v267 = vadd.f32 %v256, %v259
      %v268 = vadd.f32 %v257, %v259
      %v269 = vmax.f32 %v261, 0.0
      %v270 = vmax.f32 %v262, 0.0
      %v271 = vmax.f32 %v263, 0.0
      %v272 = vmax.f32 %v264, 0.0
      %v273 = vmax.f32 %v265, 0.0
      %v274 = vmax.f32 %v266, 0.0
      %v275 = vmax.f32 %v267, 0.0
      %v276 = vmax.f32 %v268, 0.0
      %s277 = scalar_lea.vmem %s225, 64
      %v278 = vld [vmem:[%s277] sm:$0xff]
      %v279 = vld [vmem:[%s277 + $0x8] sm:$0xff]
      %v280 = vld [vmem:[%s277 + $0x10] sm:$0xff]
      %v281 = vld [vmem:[%s277 + $0x18] sm:$0xff]
      %v282 = vld [vmem:[%s277 + $0x20] sm:$0xff]
      %v283 = vld [vmem:[%s277 + $0x28] sm:$0xff]
      %v284 = vld [vmem:[%s277 + $0x30] sm:$0xff]
      %v285 = vld [vmem:[%s277 + $0x38] sm:$0xff]
      %v286 = vmul.f32 %v278, %v248
      %v287 = vmul.f32 %v279, %v248
      %v288 = vmul.f32 %v280, %v248
      %v289 = vmul.f32 %v281, %v248
      %v290 = vmul.f32 %v282, %v248
      %v291 = vmul.f32 %v283, %v248
      %v292 = vmul.f32 %v284, %v248
      %v293 = vmul.f32 %v285, %v248
      %v294 = vadd.f32 %v286, %v259
      %v295 = vadd.f32 %v287, %v259
      %v296 = vadd.f32 %v288, %v259
      %v297 = vadd.f32 %v289, %v259
      %v298 = vadd.f32 %v290, %v259
      %v299 = vadd.f32 %v291, %v259
      %v300 = vadd.f32 %v292, %v259
      %v301 = vadd.f32 %v293, %v259
      %v302 = vmax.f32 %v294, 0.0
      %v303 = vmax.f32 %v295, 0.0
      %v304 = vmax.f32 %v296, 0.0
      %v305 = vmax.f32 %v297, 0.0
      %v306 = vmax.f32 %v298, 0.0
      %v307 = vmax.f32 %v299, 0.0
      %v308 = vmax.f32 %v300, 0.0
      %v309 = vmax.f32 %v301, 0.0
      %v310 = vadd.f32 %v269, %v302
      %v311 = vadd.f32 %v270, %v303
      %v312 = vadd.f32 %v271, %v304
      %v313 = vadd.f32 %v272, %v305
      %v314 = vadd.f32 %v273, %v306
      %v315 = vadd.f32 %v274, %v307
      %v316 = vadd.f32 %v275, %v308
      %v317 = vadd.f32 %v276, %v309
      %s318 = scalar_lea.vmem %s225, 128
      %v319 = vld [vmem:[%s318] sm:$0xff]
      %v320 = vld [vmem:[%s318 + $0x8] sm:$0xff]
      %v321 = vld [vmem:[%s318 + $0x10] sm:$0xff]
      %v322 = vld [vmem:[%s318 + $0x18] sm:$0xff]
      %v323 = vld [vmem:[%s318 + $0x20] sm:$0xff]
      %v324 = vld [vmem:[%s318 + $0x28] sm:$0xff]
      %v325 = vld [vmem:[%s318 + $0x30] sm:$0xff]
      %v326 = vld [vmem:[%s318 + $0x38] sm:$0xff]
      %v327 = vmul.f32 %v319, %v248
      %v328 = vmul.f32 %v320, %v248
      %v329 = vmul.f32 %v321, %v248
      %v330 = vmul.f32 %v322, %v248
      %v331 = vmul.f32 %v323, %v248
      %v332 = vmul.f32 %v324, %v248
      %v333 = vmul.f32 %v325, %v248
      %v334 = vmul.f32 %v326, %v248
      %v335 = vadd.f32 %v327, %v259
      %v336 = vadd.f32 %v328, %v259
      %v337 = vadd.f32 %v329, %v259
      %v338 = vadd.f32 %v330, %v259
      %v339 = vadd.f32 %v331, %v259
      %v340 = vadd.f32 %v332, %v259
      %v341 = vadd.f32 %v333, %v259
      %v342 = vadd.f32 %v334, %v259
      %v343 = vmax.f32 %v335, 0.0
      %v344 = vmax.f32 %v336, 0.0
      %v345 = vmax.f32 %v337, 0.0
      %v346 = vmax.f32 %v338, 0.0
      %v347 = vmax.f32 %v339, 0.0
      %v348 = vmax.f32 %v340, 0.0
      %v349 = vmax.f32 %v341, 0.0
      %v350 = vmax.f32 %v342, 0.0
      %v351 = vadd.f32 %v310, %v343
      %v352 = vadd.f32 %v311, %v344
      %v353 = vadd.f32 %v312, %v345
      %v354 = vadd.f32 %v313, %v346
      %v355 = vadd.f32 %v314, %v347
      %v356 = vadd.f32 %v315, %v348
      %v357 = vadd.f32 %v316, %v349
      %v358 = vadd.f32 %v317, %v350
      %s359 = scalar_lea.vmem %s225, 192
      %v360 = vld [vmem:[%s359] sm:$0xff]
      %v361 = vld [vmem:[%s359 + $0x8] sm:$0xff]
      %v362 = vld [vmem:[%s359 + $0x10] sm:$0xff]
      %v363 = vld [vmem:[%s359 + $0x18] sm:$0xff]
      %v364 = vld [vmem:[%s359 + $0x20] sm:$0xff]
      %v365 = vld [vmem:[%s359 + $0x28] sm:$0xff]
      %v366 = vld [vmem:[%s359 + $0x30] sm:$0xff]
      %v367 = vld [vmem:[%s359 + $0x38] sm:$0xff]
      %v368 = vmul.f32 %v360, %v248
      %v369 = vmul.f32 %v361, %v248
      %v370 = vmul.f32 %v362, %v248
      %v371 = vmul.f32 %v363, %v248
      %v372 = vmul.f32 %v364, %v248
      %v373 = vmul.f32 %v365, %v248
      %v374 = vmul.f32 %v366, %v248
      %v375 = vmul.f32 %v367, %v248
      %v376 = vadd.f32 %v368, %v259
      %v377 = vadd.f32 %v369, %v259
      %v378 = vadd.f32 %v370, %v259
      %v379 = vadd.f32 %v371, %v259
      %v380 = vadd.f32 %v372, %v259
      %v381 = vadd.f32 %v373, %v259
      %v382 = vadd.f32 %v374, %v259
      %v383 = vadd.f32 %v375, %v259
      %v384 = vmax.f32 %v376, 0.0
      %v385 = vmax.f32 %v377, 0.0
      %v386 = vmax.f32 %v378, 0.0
      %v387 = vmax.f32 %v379, 0.0
      %v388 = vmax.f32 %v380, 0.0
      %v389 = vmax.f32 %v381, 0.0
      %v390 = vmax.f32 %v382, 0.0
      %v391 = vmax.f32 %v383, 0.0
      %v392 = vadd.f32 %v351, %v384
      %v393 = vadd.f32 %v352, %v385
      %v394 = vadd.f32 %v353, %v386
      %v395 = vadd.f32 %v354, %v387
      %v396 = vadd.f32 %v355, %v388
      %v397 = vadd.f32 %v356, %v389
      %v398 = vadd.f32 %v357, %v390
      %v399 = vadd.f32 %v358, %v391
      %v400 = vmul.f32 %v392, 0.25
      %v401 = vmul.f32 %v393, 0.25
      %v402 = vmul.f32 %v394, 0.25
      %v403 = vmul.f32 %v395, 0.25
      %v404 = vmul.f32 %v396, 0.25
      %v405 = vmul.f32 %v397, 0.25
      %v406 = vmul.f32 %v398, 0.25
      %v407 = vmul.f32 %v399, 0.25
      %v408 = vld [vmem:[%s3] sm:$0xf]
      %vm409 = vcmask 31744
      %v411 = vsel %vm409, %v400, 0
      %v414 = vsel %vm409, %v401, 0
      %v417 = vsel %vm409, %v402, 0
      %v420 = vsel %vm409, %v403, 0
      %v423 = vsel %vm409, %v404, 0
      %v426 = vsel %vm409, %v405, 0
      %v429 = vsel %vm409, %v406, 0
      %v432 = vsel %vm409, %v407, 0
      %vm434 = vcmask 1043456
      %v436 = vsel %vm434, %v408, 0
      %438 = vmatpush.msra.mxu0 0.0
      %439 = vmatpush.msra.mxu0 0.0
      %440 = vmatpush.msra.mxu0 0.0
      %441 = vmatpush.msra.mxu0 0.0
      %442 = vmatpush.msra.mxu0 0.0
      %443 = vmatpush.msra.mxu0 0.0
      %444 = vmatpush.msra.mxu0 0.0
      %445 = vmatpush.msra.mxu0 0.0
      %446 = vmatpush.msra.mxu0 0.0
      %447 = vmatpush.msra.mxu0 0.0
      %448 = vmatpush.msra.mxu0 0.0
      %449 = vmatpush.msra.mxu0 0.0
      %450 = vmatpush.msra.mxu0 0.0
      %451 = vmatpush.msra.mxu0 0.0
      %452 = vmatpush.msra.mxu0 0.0
      %453 = vmatpush.msra.mxu0 %v436
      %454 = vmatmul.f32.gmra.mxu0 %v411
      %v455 = vpop.f32.mrf.mxu0
      %v456 = vadd.f32 0.0, %v455
      %457 = vmatmul.f32.gmra.mxu0 %v414
      %v458 = vpop.f32.mrf.mxu0
      %v459 = vadd.f32 0.0, %v458
      %460 = vmatmul.f32.gmra.mxu0 %v417
      %v461 = vpop.f32.mrf.mxu0
      %v462 = vadd.f32 0.0, %v461
      %463 = vmatmul.f32.gmra.mxu0 %v420
      %v464 = vpop.f32.mrf.mxu0
      %v465 = vadd.f32 0.0, %v464
      %466 = vmatmul.f32.gmra.mxu0 %v423
      %v467 = vpop.f32.mrf.mxu0
      %v468 = vadd.f32 0.0, %v467
      %469 = vmatmul.f32.gmra.mxu0 %v426
      %v470 = vpop.f32.mrf.mxu0
      %v471 = vadd.f32 0.0, %v470
      %472 = vmatmul.f32.gmra.mxu0 %v429
      %v473 = vpop.f32.mrf.mxu0
      %v474 = vadd.f32 0.0, %v473
      %475 = vmatmul.f32.gmra.mxu0 %v432
      %v476 = vpop.f32.mrf.mxu0
      %v477 = vadd.f32 0.0, %v476
      %478 = vdwg.mxu0
      %vm479 = vcmask 64512
      %480 = vst.msk [vmem:[%s235] sm:$0xff] %vm479, %v456
      %481 = vst.msk [vmem:[%s235 + $0x8] sm:$0xff] %vm479, %v459
      %482 = vst.msk [vmem:[%s235 + $0x10] sm:$0xff] %vm479, %v462
      %483 = vst.msk [vmem:[%s235 + $0x18] sm:$0xff] %vm479, %v465
      %484 = vst.msk [vmem:[%s235 + $0x20] sm:$0xff] %vm479, %v468
      %485 = vst.msk [vmem:[%s235 + $0x28] sm:$0xff] %vm479, %v471
      %486 = vst.msk [vmem:[%s235 + $0x30] sm:$0xff] %vm479, %v474
      %487 = vst.msk [vmem:[%s235 + $0x38] sm:$0xff] %vm479, %v477
      %s488 = smul.u32 8, %s20
      %p489 = scmp.lt.s32.totalorder %s19, 1
      %s490 = scalar_select %p489, %s19, 1
      %p491 = scmp.lt.s32.totalorder %s488, 7
      %s492 = scalar_select %p491, %s488, 7
      %s493 = smul.addr %s490, 8
      %s494 = sadd.s32 %s492, %s493
      %s495 = smul.addr %s494, 8
      %s496 = scalar_lea.vmem %s4, %s495
      // Predicated region
      $region37: #{tpu_custom_call.1} parent=35 // pred_check
        %p497 = pneg %p138
      $region38: #{tpu_custom_call.1} parent=35 // pred_check_branch
        %499 = sbr.rel (%p497) target = $region40
      $region39: #{tpu_custom_call.1} parent=35 // pred_region
        %s500 = smul.u32 8, %s20
      $region40: #{tpu_custom_call.1} parent=35 // pred_fallthru
        _
    $region36: #{tpu_custom_call.1} parent=5 // pred_fallthru
      _
    %p501 = scmp.le.s32.totalorder 2, %s10
    // Predicated region
    $region41: #{tpu_custom_call.1} parent=5 // pred_check
      %p502 = pneg %p501
    $region42: #{tpu_custom_call.1} parent=5 // pred_check_branch
      %504 = sbr.rel (%p502) target = $region44
    $region43: #{tpu_custom_call.1} parent=5 // pred_region
      %s505 = ssub.s32 %s10, 2
      // Predicated region
      $region45: #{tpu_custom_call.1} parent=43 // pred_check
        %p506 = pneg %p144
      $region46: #{tpu_custom_call.1} parent=43 // pred_check_branch
        %508 = sbr.rel (%p506) target = $region48
      $region47: #{tpu_custom_call.1} parent=43 // pred_region
        %s509 = smul.u32 8, %s22
        %p510 = scmp.lt.s32.totalorder %s21, 1
        %s511 = scalar_select %p510, %s21, 1
        %p512 = scmp.lt.s32.totalorder %s509, 7
        %s513 = scalar_select %p512, %s509, 7
        %s514 = smul.addr %s511, 8
        %s515 = sadd.s32 %s513, %s514
        %s516 = smul.addr %s515, 8
        %s517 = scalar_lea.vmem %s4, %s516
      $region48: #{tpu_custom_call.1} parent=43 // pred_fallthru
        _
    $region44: #{tpu_custom_call.1} parent=5 // pred_fallthru
      _
  $region6: #{tpu_custom_call.1} parent=0 // loop_footer
    %s14 = sadd.s32 1, %s10
  $region7: #{tpu_custom_call.1} parent=0 // loop_footer_branch
    %9 = sbr.rel target = $region3
  $region8: #{tpu_custom_call.1} parent=0 // loop_exit
    _

</llo_original>
